<compile_context>
chip_gen: v7x
topology: tpu7x:2x2x1
jax: 0.10.0
libtpu: 0.0.40
codegen_flags: <defaults>
</compile_context>

<pallas_src>
import functools

import jax
import jax.numpy as jnp
from jax.experimental import pallas as pl
from jax.experimental.pallas import tpu as pltpu

B, CIN, H, W = 2, 3, 16, 16      # batch=2, RGB, 16x16 images
Q = H * W                        # dense queries per image (= detections D)
HIDDEN = 32                      # hidden feature width of the toy detector
NUM_CLASSES = 8
HEAD = NUM_CLASSES + 4           # fused (class logits | box) head width
OUT_ROWS = 8                     # 6 detection fields padded to the f32 sublane tile


# ----------------------------------------------------------------------------
# Fused kernel (transposed layout: features on sublanes, rows B*Q on lanes):
#   feat = relu(W1/255 @ x + b1) -> head = W2 @ feat + b2
#   -> per-query best class (argmax over raw logits) + sigmoid score
#   -> cxcywh -> absolute xywh, emitted as six full-width row stores.
# ----------------------------------------------------------------------------
def _detector_kernel(x_ref, w1t_ref, b1t_ref, w2t_ref, b2t_ref, out_ref,
                     *, img_h, img_w):
    # --- model: shared trunk + fused class/box head (two MXU matmuls) --------
    feat = jnp.dot(w1t_ref[...], x_ref[...], preferred_element_type=jnp.float32)
    feat = jnp.maximum(feat + b1t_ref[...], 0.0)                      # (HIDDEN, N)
    head = jnp.dot(w2t_ref[...], feat, preferred_element_type=jnp.float32)
    head = head + b2t_ref[...]                                        # (HEAD, N)

    # --- post_processor: best class on raw logits (sigmoid is monotonic) -----
    logits = head[:NUM_CLASSES, :]                                    # (C, N)
    best_logit = jnp.max(logits, axis=0, keepdims=True)               # (1, N)
    cls_iota = jax.lax.broadcasted_iota(jnp.int32, logits.shape, 0)
    cls = jnp.min(
        jnp.where(logits >= best_logit, cls_iota, NUM_CLASSES),
        axis=0, keepdims=True,
    ).astype(jnp.float32)                                             # (1, N)
    score = jax.nn.sigmoid(best_logit)                                # (1, N)

    boxes = jax.nn.sigmoid(head[NUM_CLASSES:, :])                     # (4, N) cxcywh
    cx, cy, bw, bh = boxes[0:1, :], boxes[1:2, :], boxes[2:3, :], boxes[3:4, :]
    x0 = (cx - 0.5 * bw) * img_w
    y0 = (cy - 0.5 * bh) * img_h
    ww = bw * img_w
    hh = bh * img_h

    # Six full-width, lane-dense row stores (no sublane concat / masked slab).
    out_ref[0:1, :] = cls
    out_ref[1:2, :] = score
    out_ref[2:3, :] = x0
    out_ref[3:4, :] = y0
    out_ref[4:5, :] = ww
    out_ref[5:6, :] = hh
    # Zero the two padding rows so the output buffer is fully defined.
    out_ref[6:8, :] = jnp.zeros((2, out_ref.shape[1]), jnp.float32)


# ----------------------------------------------------------------------------
# ObjectDetector wrapper: mirrors the PyTorch module's forward, but with the
# pre_processor / model / post_processor pipeline fused into one pallas_call.
# ----------------------------------------------------------------------------
class ObjectDetector:
    def __init__(self, params):
        # Fold the raw model weights into the transposed / fused kernel layout
        # once at construction.  1/255 (pre_processor normalization) is folded
        # into w1t — linear in x, so mathematically identical.
        self.w1t = params["w1"].T * (1.0 / 255.0)                     # (HIDDEN, CIN)
        self.b1t = params["b1"].reshape(HIDDEN, 1)
        self.w2t = jnp.concatenate([params["wc"], params["wb"]], axis=1).T  # (HEAD, HIDDEN)
        self.b2t = jnp.concatenate([params["bc"], params["bb"]], axis=0).reshape(HEAD, 1)
        self._fwd = jax.jit(self._forward)

    def _forward(self, images):
        b, c, h, w = images.shape
        n = b * h * w
        # NCHW -> (C, B*H*W) transposed slab (fuses into one producer fusion).
        x_t = jnp.transpose(images, (1, 0, 2, 3)).reshape(c, n)

        kernel = functools.partial(
            _detector_kernel, img_h=float(h), img_w=float(w))

        det_t = pl.pallas_call(
            kernel,
            out_shape=jax.ShapeDtypeStruct((OUT_ROWS, n), jnp.float32),
            grid=(1,),        # single step: whole problem fits comfortably in VMEM
            in_specs=[
                pl.BlockSpec((c, n), lambda i: (0, 0)),
                pl.BlockSpec((HIDDEN, c), lambda i: (0, 0)),
                pl.BlockSpec((HIDDEN, 1), lambda i: (0, 0)),
                pl.BlockSpec((HEAD, HIDDEN), lambda i: (0, 0)),
                pl.BlockSpec((HEAD, 1), lambda i: (0, 0)),
            ],
            out_specs=pl.BlockSpec((OUT_ROWS, n), lambda i: (0, 0)),
            compiler_params=pltpu.CompilerParams(
                dimension_semantics=("arbitrary",)),
        )(x_t, self.w1t, self.b1t, self.w2t, self.b2t)

        # (8, B*Q) lane-dense kernel output -> drop pad rows -> (B, D, 6).
        det = det_t[:6, :].reshape(6, b, h * w)
        return jnp.transpose(det, (1, 2, 0))

    def __call__(self, images):
        return self._fwd(images)

    # TODO(synk): draw()/save()/compile() are host-side I/O & torch.compile glue
    # with no Pallas equivalent; only the forward pass is implemented.


def init_params(key):
    k1, k2, k3 = jax.random.split(key, 3)
    return dict(
        w1=jax.random.normal(k1, (CIN, HIDDEN), jnp.float32) * 0.1,
        b1=jnp.zeros((HIDDEN,), jnp.float32),
        wc=jax.random.normal(k2, (HIDDEN, NUM_CLASSES), jnp.float32) * 0.1,
        bc=jnp.zeros((NUM_CLASSES,), jnp.float32),
        wb=jax.random.normal(k3, (HIDDEN, 4), jnp.float32) * 0.1,
        bb=jnp.zeros((4,), jnp.float32),
    )


if __name__ == "__main__":
    key = jax.random.PRNGKey(0)
    k_img, k_par = jax.random.split(key)
    images = jax.random.uniform(k_img, (B, CIN, H, W), jnp.float32, 0.0, 255.0)
    params = init_params(k_par)

    detector = ObjectDetector(params)
    detections = jax.block_until_ready(detector(images))

    assert detections.shape == (B, Q, 6), detections.shape
    assert bool(jnp.all(jnp.isfinite(detections)))
    # class ids must be valid; scores come from a sigmoid -> [0, 1]
    assert bool(jnp.all((detections[..., 0] >= 0) & (detections[..., 0] < NUM_CLASSES)))
    assert bool(jnp.all((detections[..., 1] >= 0.0) & (detections[..., 1] <= 1.0)))
    print("KERNEL_OK")
</pallas_src>

<mosaic_0001>
module attributes {stable_mosaic.version = 11 : i64} {
  func.func @_detector_kernel(%arg0: i32, %arg1: memref<3x512xf32, #tpu.memory_space<vmem>>, %arg2: memref<32x3xf32, #tpu.memory_space<vmem>>, %arg3: memref<32x1xf32, #tpu.memory_space<vmem>>, %arg4: memref<12x32xf32, #tpu.memory_space<vmem>>, %arg5: memref<12x1xf32, #tpu.memory_space<vmem>>, %arg6: memref<8x512xf32, #tpu.memory_space<vmem>>) attributes {dimension_semantics = [#tpu.dimension_semantics<arbitrary>], iteration_bounds = array<i64: 1>, scalar_prefetch = 0 : i64, scratch_operands = 0 : i64, tpu.core_type = #tpu.core_type<tc>, window_params = [{pipeline_mode = #tpu.pipeline_mode<synchronous>, transform_indices = @transform_0, window_bounds = array<i64: 3, 512>}, {pipeline_mode = #tpu.pipeline_mode<synchronous>, transform_indices = @transform_1, window_bounds = array<i64: 32, 3>}, {pipeline_mode = #tpu.pipeline_mode<synchronous>, transform_indices = @transform_2, window_bounds = array<i64: 32, 1>}, {pipeline_mode = #tpu.pipeline_mode<synchronous>, transform_indices = @transform_3, window_bounds = array<i64: 12, 32>}, {pipeline_mode = #tpu.pipeline_mode<synchronous>, transform_indices = @transform_4, window_bounds = array<i64: 12, 1>}, {pipeline_mode = #tpu.pipeline_mode<synchronous>, transform_indices = @transform_5, window_bounds = array<i64: 8, 512>}]} {
    %c0 = arith.constant 0 : index
    %c0_0 = arith.constant 0 : index
    %0 = vector.load %arg2[%c0, %c0_0] : memref<32x3xf32, #tpu.memory_space<vmem>>, vector<32x3xf32>
    %c0_1 = arith.constant 0 : index
    %c0_2 = arith.constant 0 : index
    %1 = vector.load %arg1[%c0_1, %c0_2] : memref<3x512xf32, #tpu.memory_space<vmem>>, vector<3x512xf32>
    %cst = arith.constant dense<0.000000e+00> : vector<32x512xf32>
    %2 = tpu.matmul %0, %1, %cst {dimension_numbers = #tpu.dot_dimension_numbers<[1], [0], [0], [1], [0, 0, 1, 1], [], []>} : vector<32x3xf32>, vector<3x512xf32>, vector<32x512xf32> -> vector<32x512xf32>
    %c0_3 = arith.constant 0 : index
    %c0_4 = arith.constant 0 : index
    %3 = vector.load %arg3[%c0_3, %c0_4] : memref<32x1xf32, #tpu.memory_space<vmem>>, vector<32x1xf32>
    %4 = vector.broadcast %3 : vector<32x1xf32> to vector<32x512xf32>
    %5 = arith.addf %2, %4 : vector<32x512xf32>
    %cst_5 = arith.constant 0.000000e+00 : f32
    %6 = vector.broadcast %cst_5 : f32 to vector<32x512xf32>
    %7 = arith.maximumf %5, %6 : vector<32x512xf32>
    %c0_6 = arith.constant 0 : index
    %c0_7 = arith.constant 0 : index
    %8 = vector.load %arg4[%c0_6, %c0_7] : memref<12x32xf32, #tpu.memory_space<vmem>>, vector<12x32xf32>
    %cst_8 = arith.constant dense<0.000000e+00> : vector<12x512xf32>
    %9 = tpu.matmul %8, %7, %cst_8 {dimension_numbers = #tpu.dot_dimension_numbers<[1], [0], [0], [1], [0, 0, 1, 1], [], []>} : vector<12x32xf32>, vector<32x512xf32>, vector<12x512xf32> -> vector<12x512xf32>
    %c0_9 = arith.constant 0 : index
    %c0_10 = arith.constant 0 : index
    %10 = vector.load %arg5[%c0_9, %c0_10] : memref<12x1xf32, #tpu.memory_space<vmem>>, vector<12x1xf32>
    %11 = vector.broadcast %10 : vector<12x1xf32> to vector<12x512xf32>
    %12 = arith.addf %9, %11 : vector<12x512xf32>
    %13 = vector.extract_strided_slice %12 {offsets = [0, 0], sizes = [8, 512], strides = [1, 1]} : vector<12x512xf32> to vector<8x512xf32>
    %cst_11 = arith.constant dense<0xFF800000> : vector<512xf32>
    %14 = vector.multi_reduction <maximumf>, %13, %cst_11 [0] : vector<8x512xf32> to vector<512xf32>
    %15 = vector.shape_cast %14 : vector<512xf32> to vector<1x512xf32>
    %16 = tpu.iota {dimensions = array<i32: 0>} : vector<8x512xi32>
    %17 = vector.broadcast %15 : vector<1x512xf32> to vector<8x512xf32>
    %18 = arith.cmpf oge, %13, %17 : vector<8x512xf32>
    %c8_i32 = arith.constant 8 : i32
    %19 = vector.broadcast %c8_i32 : i32 to vector<8x512xi32>
    %20 = arith.select %18, %16, %19 : vector<8x512xi1>, vector<8x512xi32>
    %cst_12 = arith.constant dense<2147483647> : vector<512xi32>
    %21 = vector.multi_reduction <minsi>, %20, %cst_12 [0] : vector<8x512xi32> to vector<512xi32>
    %22 = vector.shape_cast %21 : vector<512xi32> to vector<1x512xi32>
    %23 = arith.sitofp %22 : vector<1x512xi32> to vector<1x512xf32>
    %24 = arith.negf %15 : vector<1x512xf32>
    %25 = math.exp %24 : vector<1x512xf32>
    %cst_13 = arith.constant 1.000000e+00 : f32
    %26 = vector.broadcast %cst_13 : f32 to vector<1x512xf32>
    %27 = arith.addf %26, %25 : vector<1x512xf32>
    %28 = arith.divf %26, %27 : vector<1x512xf32>
    %29 = vector.extract_strided_slice %12 {offsets = [8, 0], sizes = [4, 512], strides = [1, 1]} : vector<12x512xf32> to vector<4x512xf32>
    %30 = arith.negf %29 : vector<4x512xf32>
    %31 = math.exp %30 : vector<4x512xf32>
    %cst_14 = arith.constant 1.000000e+00 : f32
    %32 = vector.broadcast %cst_14 : f32 to vector<4x512xf32>
    %33 = arith.addf %32, %31 : vector<4x512xf32>
    %34 = arith.divf %32, %33 : vector<4x512xf32>
    %35 = vector.extract_strided_slice %34 {offsets = [0, 0], sizes = [1, 512], strides = [1, 1]} : vector<4x512xf32> to vector<1x512xf32>
    %36 = vector.extract_strided_slice %34 {offsets = [1, 0], sizes = [1, 512], strides = [1, 1]} : vector<4x512xf32> to vector<1x512xf32>
    %37 = vector.extract_strided_slice %34 {offsets = [2, 0], sizes = [1, 512], strides = [1, 1]} : vector<4x512xf32> to vector<1x512xf32>
    %38 = vector.extract_strided_slice %34 {offsets = [3, 0], sizes = [1, 512], strides = [1, 1]} : vector<4x512xf32> to vector<1x512xf32>
    %cst_15 = arith.constant 5.000000e-01 : f32
    %39 = vector.broadcast %cst_15 : f32 to vector<1x512xf32>
    %40 = arith.mulf %39, %37 : vector<1x512xf32>
    %41 = arith.subf %35, %40 : vector<1x512xf32>
    %cst_16 = arith.constant 1.600000e+01 : f32
    %42 = vector.broadcast %cst_16 : f32 to vector<1x512xf32>
    %43 = arith.mulf %41, %42 : vector<1x512xf32>
    %cst_17 = arith.constant 5.000000e-01 : f32
    %44 = vector.broadcast %cst_17 : f32 to vector<1x512xf32>
    %45 = arith.mulf %44, %38 : vector<1x512xf32>
    %46 = arith.subf %36, %45 : vector<1x512xf32>
    %cst_18 = arith.constant 1.600000e+01 : f32
    %47 = vector.broadcast %cst_18 : f32 to vector<1x512xf32>
    %48 = arith.mulf %46, %47 : vector<1x512xf32>
    %cst_19 = arith.constant 1.600000e+01 : f32
    %49 = vector.broadcast %cst_19 : f32 to vector<1x512xf32>
    %50 = arith.mulf %37, %49 : vector<1x512xf32>
    %cst_20 = arith.constant 1.600000e+01 : f32
    %51 = vector.broadcast %cst_20 : f32 to vector<1x512xf32>
    %52 = arith.mulf %38, %51 : vector<1x512xf32>
    %c0_21 = arith.constant 0 : index
    %c0_22 = arith.constant 0 : index
    %53 = vector.load %arg6[%c0_21, %c0_22] : memref<8x512xf32, #tpu.memory_space<vmem>>, vector<1x512xf32>
    tpu.vector_store %arg6[%c0_21, %c0_22], %23 {strides = array<i32>} : memref<8x512xf32, #tpu.memory_space<vmem>>, vector<1x512xf32>,
    %c1 = arith.constant 1 : index
    %c0_23 = arith.constant 0 : index
    %54 = vector.load %arg6[%c1, %c0_23] : memref<8x512xf32, #tpu.memory_space<vmem>>, vector<1x512xf32>
    tpu.vector_store %arg6[%c1, %c0_23], %28 {strides = array<i32>} : memref<8x512xf32, #tpu.memory_space<vmem>>, vector<1x512xf32>,
    %c2 = arith.constant 2 : index
    %c0_24 = arith.constant 0 : index
    %55 = vector.load %arg6[%c2, %c0_24] : memref<8x512xf32, #tpu.memory_space<vmem>>, vector<1x512xf32>
    tpu.vector_store %arg6[%c2, %c0_24], %43 {strides = array<i32>} : memref<8x512xf32, #tpu.memory_space<vmem>>, vector<1x512xf32>,
    %c3 = arith.constant 3 : index
    %c0_25 = arith.constant 0 : index
    %56 = vector.load %arg6[%c3, %c0_25] : memref<8x512xf32, #tpu.memory_space<vmem>>, vector<1x512xf32>
    tpu.vector_store %arg6[%c3, %c0_25], %48 {strides = array<i32>} : memref<8x512xf32, #tpu.memory_space<vmem>>, vector<1x512xf32>,
    %c4 = arith.constant 4 : index
    %c0_26 = arith.constant 0 : index
    %57 = vector.load %arg6[%c4, %c0_26] : memref<8x512xf32, #tpu.memory_space<vmem>>, vector<1x512xf32>
    tpu.vector_store %arg6[%c4, %c0_26], %50 {strides = array<i32>} : memref<8x512xf32, #tpu.memory_space<vmem>>, vector<1x512xf32>,
    %c5 = arith.constant 5 : index
    %c0_27 = arith.constant 0 : index
    %58 = vector.load %arg6[%c5, %c0_27] : memref<8x512xf32, #tpu.memory_space<vmem>>, vector<1x512xf32>
    tpu.vector_store %arg6[%c5, %c0_27], %52 {strides = array<i32>} : memref<8x512xf32, #tpu.memory_space<vmem>>, vector<1x512xf32>,
    %cst_28 = arith.constant 0.000000e+00 : f32
    %59 = vector.broadcast %cst_28 : f32 to vector<2x512xf32>
    %c6 = arith.constant 6 : index
    %c0_29 = arith.constant 0 : index
    %60 = vector.load %arg6[%c6, %c0_29] : memref<8x512xf32, #tpu.memory_space<vmem>>, vector<2x512xf32>
    tpu.vector_store %arg6[%c6, %c0_29], %59 {strides = array<i32>} : memref<8x512xf32, #tpu.memory_space<vmem>>, vector<2x512xf32>,
    return
  }
  func.func @transform_0(%arg0: i32) -> (i32, i32) {
    %c0_i32 = arith.constant 0 : i32
    %c0_i32_0 = arith.constant 0 : i32
    %c0_i32_1 = arith.constant 0 : i32
    return %c0_i32, %c0_i32_0 : i32, i32
  }
  func.func @transform_1(%arg0: i32) -> (i32, i32) {
    %c0_i32 = arith.constant 0 : i32
    %c0_i32_0 = arith.constant 0 : i32
    %c0_i32_1 = arith.constant 0 : i32
    return %c0_i32, %c0_i32_0 : i32, i32
  }
  func.func @transform_2(%arg0: i32) -> (i32, i32) {
    %c0_i32 = arith.constant 0 : i32
    %c0_i32_0 = arith.constant 0 : i32
    %c0_i32_1 = arith.constant 0 : i32
    return %c0_i32, %c0_i32_0 : i32, i32
  }
  func.func @transform_3(%arg0: i32) -> (i32, i32) {
    %c0_i32 = arith.constant 0 : i32
    %c0_i32_0 = arith.constant 0 : i32
    %c0_i32_1 = arith.constant 0 : i32
    return %c0_i32, %c0_i32_0 : i32, i32
  }
  func.func @transform_4(%arg0: i32) -> (i32, i32) {
    %c0_i32 = arith.constant 0 : i32
    %c0_i32_0 = arith.constant 0 : i32
    %c0_i32_1 = arith.constant 0 : i32
    return %c0_i32, %c0_i32_0 : i32, i32
  }
  func.func @transform_5(%arg0: i32) -> (i32, i32) {
    %c0_i32 = arith.constant 0 : i32
    %c0_i32_0 = arith.constant 0 : i32
    %c0_i32_1 = arith.constant 0 : i32
    return %c0_i32, %c0_i32_0 : i32, i32
  }
}

</mosaic_0001>

<llo_original>
// kernel: _forward.1
$region0: #{_forward.1}
  #allocation0 [shape = 'u32[]', space=smem, size = 0x4, offset = 0x4, fixed_abs, tag = 'smem constant byte address 0x4 - core index']
  #allocation1 [shape = 'u32[144,128]{1,0:T(1,128)}', space=vmem, size = 0x12000, scoped, tag = 'internal scratch']
  %s0 = inlined_call_operand.vmem [shape: f32[3,512], index: 0, kind: input, shape index: {}]
  %s1 = inlined_call_operand.vmem [shape: f32[32,3], index: 1, kind: input, shape index: {}]
  %s2 = inlined_call_operand.vmem [shape: f32[32,1], index: 2, kind: input, shape index: {}]
  %s3 = inlined_call_operand.vmem [shape: f32[12,32], index: 3, kind: input, shape index: {}]
  %s4 = inlined_call_operand.vmem [shape: f32[12,1], index: 4, kind: input, shape index: {}]
  %s5 = inlined_call_operand.vmem [shape: f32[8,512], index: 5, kind: output, shape index: {}]
  %s6 = sld [smem:[#allocation0]]
  $region30: #{_forward.1} parent=0
    _
  %s8 = ssub.s32 1, %s6
  %s9 = scalar_select 0, %s8, %s6
  // Predicated region
  $region2: #{_forward.1} parent=0 // pred_check
    _
  $region3: #{_forward.1} parent=0 // pred_check_branch
    %11 = sbr.rel (0) target = $region5
  $region4: #{_forward.1} parent=0 // pred_region
    _
  $region5: #{_forward.1} parent=0 // pred_fallthru
    _
  // Predicated region
  $region6: #{_forward.1} parent=0 // pred_check
    _
  $region7: #{_forward.1} parent=0 // pred_check_branch
    %13 = sbr.rel (0) target = $region9
  $region8: #{_forward.1} parent=0 // pred_region
    _
  $region9: #{_forward.1} parent=0 // pred_fallthru
    _
  // Predicated region
  $region10: #{_forward.1} parent=0 // pred_check
    _
  $region11: #{_forward.1} parent=0 // pred_check_branch
    %15 = sbr.rel (0) target = $region13
  $region12: #{_forward.1} parent=0 // pred_region
    _
  $region13: #{_forward.1} parent=0 // pred_fallthru
    _
  // Predicated region
  $region14: #{_forward.1} parent=0 // pred_check
    _
  $region15: #{_forward.1} parent=0 // pred_check_branch
    %17 = sbr.rel (0) target = $region17
  $region16: #{_forward.1} parent=0 // pred_region
    _
  $region17: #{_forward.1} parent=0 // pred_fallthru
    _
  // Predicated region
  $region18: #{_forward.1} parent=0 // pred_check
    _
  $region19: #{_forward.1} parent=0 // pred_check_branch
    %19 = sbr.rel (0) target = $region21
  $region20: #{_forward.1} parent=0 // pred_region
    _
  $region21: #{_forward.1} parent=0 // pred_fallthru
    _
  %v20 = vld [vmem:[%s1] sm:$0xff]
  %v21 = vld [vmem:[%s1 + $0x8] sm:$0xff]
  %v22 = vld [vmem:[%s1 + $0x10] sm:$0xff]
  %v23 = vld [vmem:[%s1 + $0x18] sm:$0xff]
  %v24 = vld [vmem:[%s0] sm:$0x77]
  %v25 = vld [vmem:[%s0 + $0x8] sm:$0x77]
  %v26 = vld [vmem:[%s2] sm:$0xff]
  %v27 = vld [vmem:[%s2 + $0x8] sm:$0xff]
  %v28 = vld [vmem:[%s2 + $0x10] sm:$0xff]
  %v29 = vld [vmem:[%s2 + $0x18] sm:$0xff]
  %31 = vset.pattern.permute.xlu0 0
  %32 = vperm.xlu0 %31, %v26
  %v33 = vpop.permute.xlu0 %32
  %36 = vset.pattern.permute.xlu0 0
  %37 = vperm.xlu0 %36, %v27
  %v38 = vpop.permute.xlu0 %37
  %41 = vset.pattern.permute.xlu0 0
  %42 = vperm.xlu0 %41, %v28
  %v43 = vpop.permute.xlu0 %42
  %46 = vset.pattern.permute.xlu0 0
  %47 = vperm.xlu0 %46, %v29
  %v48 = vpop.permute.xlu0 %47
  %v52 = vcombine.high %v24, %v24
  %v53 = vcombine.high %v25, %v25
  %vm54 = vcmask 23552
  %v56 = vsel %vm54, %v20, 0
  %v59 = vsel %vm54, %v21, 0
  %v62 = vsel %vm54, %v22, 0
  %v65 = vsel %vm54, %v23, 0
  %vm67 = vcmask 1042432
  %v68 = vsel %vm67, %v24, 0
  %v70 = vsel %vm67, %v52, 0
  %v72 = vsel %vm67, %v25, 0
  %v74 = vsel %vm67, %v53, 0
  %76 = vmatprep.subr.mxu0 %v70
  %77 = vmatpush1.msra.mxu0 %v68
  %78 = vmatprep.subr.mxu0 0.0
  %79 = vmatpush1.msra.mxu0 0.0
  %80 = vmatprep.subr.mxu0 0.0
  %81 = vmatpush1.msra.mxu0 0.0
  %82 = vmatprep.subr.mxu0 0.0
  %83 = vmatpush1.msra.mxu0 0.0
  %84 = vmatprep.subr.mxu0 0.0
  %85 = vmatpush1.msra.mxu0 0.0
  %86 = vmatprep.subr.mxu0 0.0
  %87 = vmatpush1.msra.mxu0 0.0
  %88 = vmatprep.subr.mxu0 0.0
  %89 = vmatpush1.msra.mxu0 0.0
  %90 = vmatprep.subr.mxu0 0.0
  %91 = vmatpush1.msra.mxu0 0.0
  %92 = vmatprep.subr.mxu0 0.0
  %93 = vmatpush1.msra.mxu0 0.0
  %94 = vmatprep.subr.mxu0 0.0
  %95 = vmatpush1.msra.mxu0 0.0
  %96 = vmatprep.subr.mxu0 0.0
  %97 = vmatpush1.msra.mxu0 0.0
  %98 = vmatprep.subr.mxu0 0.0
  %99 = vmatpush1.msra.mxu0 0.0
  %100 = vmatprep.subr.mxu0 0.0
  %101 = vmatpush1.msra.mxu0 0.0
  %102 = vmatprep.subr.mxu0 0.0
  %103 = vmatpush1.msra.mxu0 0.0
  %104 = vmatprep.subr.mxu0 0.0
  %105 = vmatpush1.msra.mxu0 0.0
  %106 = vmatprep.subr.mxu0 0.0
  %107 = vmatpush1.msra.mxu0 0.0
  %108 = vmatprep.subr.mxu0 0.0
  %109 = vmatpush1.msra.mxu0 0.0
  %110 = vmatprep.subr.mxu0 0.0
  %111 = vmatpush1.msra.mxu0 0.0
  %112 = vmatprep.subr.mxu0 0.0
  %113 = vmatpush1.msra.mxu0 0.0
  %114 = vmatprep.subr.mxu0 0.0
  %115 = vmatpush1.msra.mxu0 0.0
  %116 = vmatprep.subr.mxu0 0.0
  %117 = vmatpush1.msra.mxu0 0.0
  %118 = vmatprep.subr.mxu0 0.0
  %119 = vmatpush1.msra.mxu0 0.0
  %120 = vmatprep.subr.mxu0 0.0
  %121 = vmatpush1.msra.mxu0 0.0
  %122 = vmatprep.subr.mxu0 0.0
  %123 = vmatpush1.msra.mxu0 0.0
  %124 = vmatprep.subr.mxu0 0.0
  %125 = vmatpush1.msra.mxu0 0.0
  %126 = vmatprep.subr.mxu0 0.0
  %127 = vmatpush1.msra.mxu0 0.0
  %128 = vmatprep.subr.mxu0 0.0
  %129 = vmatpush1.msra.mxu0 0.0
  %130 = vmatprep.subr.mxu0 0.0
  %131 = vmatpush1.msra.mxu0 0.0
  %132 = vmatprep.subr.mxu0 0.0
  %133 = vmatpush1.msra.mxu0 0.0
  %134 = vmatprep.subr.mxu0 0.0
  %135 = vmatpush1.msra.mxu0 0.0
  %136 = vmatprep.subr.mxu0 0.0
  %137 = vmatpush1.msra.mxu0 0.0
  %138 = vmatprep.subr.mxu0 0.0
  %139 = vmatpush1.msra.mxu0 0.0
  %140 = vmatprep.mubr.f32.mxu0 0.0
  %141 = vmatmul.mubr.f32.gmra.mrb[0].mxu0 %v56
  %v142 = vpop.f32.mrb[0].mxu0
  %v143 = vadd.f32 %v33, %v142
  %v144 = vpop.f32.mrb[0].mxu0
  %v145 = vadd.f32 %v33, %v144
  %146 = vmatprep.mubr.f32.mxu0 0.0
  %147 = vmatmul.mubr.f32.gmra.mrb[0].mxu0 %v59
  %v148 = vpop.f32.mrb[0].mxu0
  %v149 = vadd.f32 %v38, %v148
  %v150 = vpop.f32.mrb[0].mxu0
  %v151 = vadd.f32 %v38, %v150
  %152 = vmatprep.mubr.f32.mxu0 0.0
  %153 = vmatmul.mubr.f32.gmra.mrb[0].mxu0 %v62
  %v154 = vpop.f32.mrb[0].mxu0
  %v155 = vadd.f32 %v43, %v154
  %v156 = vpop.f32.mrb[0].mxu0
  %v157 = vadd.f32 %v43, %v156
  %158 = vmatprep.mubr.f32.mxu0 0.0
  %159 = vmatmul.mubr.f32.gmra.mrb[0].mxu0 %v65
  %v160 = vpop.f32.mrb[0].mxu0
  %v161 = vadd.f32 %v48, %v160
  %v162 = vpop.f32.mrb[0].mxu0
  %v163 = vadd.f32 %v48, %v162
  %164 = vdwg.mxu0
  %165 = vmatprep.subr.mxu0 %v74
  %166 = vmatpush1.msra.mxu0 %v72
  %167 = vmatprep.subr.mxu0 0.0
  %168 = vmatpush1.msra.mxu0 0.0
  %169 = vmatprep.subr.mxu0 0.0
  %170 = vmatpush1.msra.mxu0 0.0
  %171 = vmatprep.subr.mxu0 0.0
  %172 = vmatpush1.msra.mxu0 0.0
  %173 = vmatprep.subr.mxu0 0.0
  %174 = vmatpush1.msra.mxu0 0.0
  %175 = vmatprep.subr.mxu0 0.0
  %176 = vmatpush1.msra.mxu0 0.0
  %177 = vmatprep.subr.mxu0 0.0
  %178 = vmatpush1.msra.mxu0 0.0
  %179 = vmatprep.subr.mxu0 0.0
  %180 = vmatpush1.msra.mxu0 0.0
  %181 = vmatprep.subr.mxu0 0.0
  %182 = vmatpush1.msra.mxu0 0.0
  %183 = vmatprep.subr.mxu0 0.0
  %184 = vmatpush1.msra.mxu0 0.0
  %185 = vmatprep.subr.mxu0 0.0
  %186 = vmatpush1.msra.mxu0 0.0
  %187 = vmatprep.subr.mxu0 0.0
  %188 = vmatpush1.msra.mxu0 0.0
  %189 = vmatprep.subr.mxu0 0.0
  %190 = vmatpush1.msra.mxu0 0.0
  %191 = vmatprep.subr.mxu0 0.0
  %192 = vmatpush1.msra.mxu0 0.0
  %193 = vmatprep.subr.mxu0 0.0
  %194 = vmatpush1.msra.mxu0 0.0
  %195 = vmatprep.subr.mxu0 0.0
  %196 = vmatpush1.msra.mxu0 0.0
  %197 = vmatprep.subr.mxu0 0.0
  %198 = vmatpush1.msra.mxu0 0.0
  %199 = vmatprep.subr.mxu0 0.0
  %200 = vmatpush1.msra.mxu0 0.0
  %201 = vmatprep.subr.mxu0 0.0
  %202 = vmatpush1.msra.mxu0 0.0
  %203 = vmatprep.subr.mxu0 0.0
  %204 = vmatpush1.msra.mxu0 0.0
  %205 = vmatprep.subr.mxu0 0.0
  %206 = vmatpush1.msra.mxu0 0.0
  %207 = vmatprep.subr.mxu0 0.0
  %208 = vmatpush1.msra.mxu0 0.0
  %209 = vmatprep.subr.mxu0 0.0
  %210 = vmatpush1.msra.mxu0 0.0
  %211 = vmatprep.subr.mxu0 0.0
  %212 = vmatpush1.msra.mxu0 0.0
  %213 = vmatprep.subr.mxu0 0.0
  %214 = vmatpush1.msra.mxu0 0.0
  %215 = vmatprep.subr.mxu0 0.0
  %216 = vmatpush1.msra.mxu0 0.0
  %217 = vmatprep.subr.mxu0 0.0
  %218 = vmatpush1.msra.mxu0 0.0
  %219 = vmatprep.subr.mxu0 0.0
  %220 = vmatpush1.msra.mxu0 0.0
  %221 = vmatprep.subr.mxu0 0.0
  %222 = vmatpush1.msra.mxu0 0.0
  %223 = vmatprep.subr.mxu0 0.0
  %224 = vmatpush1.msra.mxu0 0.0
  %225 = vmatprep.subr.mxu0 0.0
  %226 = vmatpush1.msra.mxu0 0.0
  %227 = vmatprep.subr.mxu0 0.0
  %228 = vmatpush1.msra.mxu0 0.0
  %229 = vmatprep.mubr.f32.mxu0 0.0
  %230 = vmatmul.mubr.f32.gmra.mrb[0].mxu0 %v56
  %v231 = vpop.f32.mrb[0].mxu0
  %v232 = vadd.f32 %v33, %v231
  %v233 = vpop.f32.mrb[0].mxu0
  %v234 = vadd.f32 %v33, %v233
  %235 = vmatprep.mubr.f32.mxu0 0.0
  %236 = vmatmul.mubr.f32.gmra.mrb[0].mxu0 %v59
  %v237 = vpop.f32.mrb[0].mxu0
  %v238 = vadd.f32 %v38, %v237
  %v239 = vpop.f32.mrb[0].mxu0
  %v240 = vadd.f32 %v38, %v239
  %241 = vmatprep.mubr.f32.mxu0 0.0
  %242 = vmatmul.mubr.f32.gmra.mrb[0].mxu0 %v62
  %v243 = vpop.f32.mrb[0].mxu0
  %v244 = vadd.f32 %v43, %v243
  %v245 = vpop.f32.mrb[0].mxu0
  %v246 = vadd.f32 %v43, %v245
  %247 = vmatprep.mubr.f32.mxu0 0.0
  %248 = vmatmul.mubr.f32.gmra.mrb[0].mxu0 %v65
  %v249 = vpop.f32.mrb[0].mxu0
  %v250 = vadd.f32 %v48, %v249
  %v251 = vpop.f32.mrb[0].mxu0
  %v252 = vadd.f32 %v48, %v251
  %253 = vdwg.mxu0
  %v254 = vmax.f32 %v143, 0.0
  %v255 = vmax.f32 %v145, 0.0
  %v256 = vmax.f32 %v232, 0.0
  %v257 = vmax.f32 %v234, 0.0
  %v258 = vmax.f32 %v149, 0.0
  %v259 = vmax.f32 %v151, 0.0
  %v260 = vmax.f32 %v238, 0.0
  %v261 = vmax.f32 %v240, 0.0
  %v262 = vmax.f32 %v155, 0.0
  %v263 = vmax.f32 %v157, 0.0
  %v264 = vmax.f32 %v244, 0.0
  %v265 = vmax.f32 %v246, 0.0
  %v266 = vmax.f32 %v161, 0.0
  %v267 = vmax.f32 %v163, 0.0
  %v268 = vmax.f32 %v250, 0.0
  %v269 = vmax.f32 %v252, 0.0
  %v270 = vld [vmem:[%s3] sm:$0xff]
  %v271 = vld [vmem:[%s3 + $0x8] sm:$0xf]
  %v272 = vld [vmem:[%s4] sm:$0xff]
  %v273 = vld [vmem:[%s4 + $0x8] sm:$0xf]
  %275 = vset.pattern.permute.xlu0 0
  %276 = vperm.xlu0 %275, %v272
  %v277 = vpop.permute.xlu0 %276
  %280 = vset.pattern.permute.xlu0 0
  %281 = vperm.xlu0 %280, %v273
  %v282 = vpop.permute.xlu0 %281
  %vm284 = vcmask 261120
  %v286 = vsel %vm284, %v270, 0
  %v289 = vsel %vm284, %v271, 0
  %291 = vmatprep.subr.mxu0 %v255
  %292 = vmatpush1.msra.mxu0 %v254
  %293 = vmatprep.subr.mxu0 %v259
  %294 = vmatpush1.msra.mxu0 %v258
  %295 = vmatprep.subr.mxu0 %v263
  %296 = vmatpush1.msra.mxu0 %v262
  %297 = vmatprep.subr.mxu0 %v267
  %298 = vmatpush1.msra.mxu0 %v266
  %299 = vmatprep.subr.mxu0 0.0
  %300 = vmatpush1.msra.mxu0 0.0
  %301 = vmatprep.subr.mxu0 0.0
  %302 = vmatpush1.msra.mxu0 0.0
  %303 = vmatprep.subr.mxu0 0.0
  %304 = vmatpush1.msra.mxu0 0.0
  %305 = vmatprep.subr.mxu0 0.0
  %306 = vmatpush1.msra.mxu0 0.0
  %307 = vmatprep.subr.mxu0 0.0
  %308 = vmatpush1.msra.mxu0 0.0
  %309 = vmatprep.subr.mxu0 0.0
  %310 = vmatpush1.msra.mxu0 0.0
  %311 = vmatprep.subr.mxu0 0.0
  %312 = vmatpush1.msra.mxu0 0.0
  %313 = vmatprep.subr.mxu0 0.0
  %314 = vmatpush1.msra.mxu0 0.0
  %315 = vmatprep.subr.mxu0 0.0
  %316 = vmatpush1.msra.mxu0 0.0
  %317 = vmatprep.subr.mxu0 0.0
  %318 = vmatpush1.msra.mxu0 0.0
  %319 = vmatprep.subr.mxu0 0.0
  %320 = vmatpush1.msra.mxu0 0.0
  %321 = vmatprep.subr.mxu0 0.0
  %322 = vmatpush1.msra.mxu0 0.0
  %323 = vmatprep.subr.mxu0 0.0
  %324 = vmatpush1.msra.mxu0 0.0
  %325 = vmatprep.subr.mxu0 0.0
  %326 = vmatpush1.msra.mxu0 0.0
  %327 = vmatprep.subr.mxu0 0.0
  %328 = vmatpush1.msra.mxu0 0.0
  %329 = vmatprep.subr.mxu0 0.0
  %330 = vmatpush1.msra.mxu0 0.0
  %331 = vmatprep.subr.mxu0 0.0
  %332 = vmatpush1.msra.mxu0 0.0
  %333 = vmatprep.subr.mxu0 0.0
  %334 = vmatpush1.msra.mxu0 0.0
  %335 = vmatprep.subr.mxu0 0.0
  %336 = vmatpush1.msra.mxu0 0.0
  %337 = vmatprep.subr.mxu0 0.0
  %338 = vmatpush1.msra.mxu0 0.0
  %339 = vmatprep.subr.mxu0 0.0
  %340 = vmatpush1.msra.mxu0 0.0
  %341 = vmatprep.subr.mxu0 0.0
  %342 = vmatpush1.msra.mxu0 0.0
  %343 = vmatprep.subr.mxu0 0.0
  %344 = vmatpush1.msra.mxu0 0.0
  %345 = vmatprep.subr.mxu0 0.0
  %346 = vmatpush1.msra.mxu0 0.0
  %347 = vmatprep.subr.mxu0 0.0
  %348 = vmatpush1.msra.mxu0 0.0
  %349 = vmatprep.subr.mxu0 0.0
  %350 = vmatpush1.msra.mxu0 0.0
  %351 = vmatprep.subr.mxu0 0.0
  %352 = vmatpush1.msra.mxu0 0.0
  %353 = vmatprep.subr.mxu0 0.0
  %354 = vmatpush1.msra.mxu0 0.0
  %355 = vmatprep.mubr.f32.mxu0 0.0
  %356 = vmatmul.mubr.f32.gmra.mrb[0].mxu0 %v286
  %v357 = vpop.f32.mrb[0].mxu0
  %v358 = vadd.f32 %v277, %v357
  %v359 = vpop.f32.mrb[0].mxu0
  %v360 = vadd.f32 %v277, %v359
  %361 = vmatprep.mubr.f32.mxu0 0.0
  %362 = vmatmul.mubr.f32.gmra.mrb[0].mxu0 %v289
  %v363 = vpop.f32.mrb[0].mxu0
  %v364 = vadd.f32 %v282, %v363
  %v365 = vpop.f32.mrb[0].mxu0
  %v366 = vadd.f32 %v282, %v365
  %367 = vdwg.mxu0
  %368 = vmatprep.subr.mxu0 %v257
  %369 = vmatpush1.msra.mxu0 %v256
  %370 = vmatprep.subr.mxu0 %v261
  %371 = vmatpush1.msra.mxu0 %v260
  %372 = vmatprep.subr.mxu0 %v265
  %373 = vmatpush1.msra.mxu0 %v264
  %374 = vmatprep.subr.mxu0 %v269
  %375 = vmatpush1.msra.mxu0 %v268
  %376 = vmatprep.subr.mxu0 0.0
  %377 = vmatpush1.msra.mxu0 0.0
  %378 = vmatprep.subr.mxu0 0.0
  %379 = vmatpush1.msra.mxu0 0.0
  %380 = vmatprep.subr.mxu0 0.0
  %381 = vmatpush1.msra.mxu0 0.0
  %382 = vmatprep.subr.mxu0 0.0
  %383 = vmatpush1.msra.mxu0 0.0
  %384 = vmatprep.subr.mxu0 0.0
  %385 = vmatpush1.msra.mxu0 0.0
  %386 = vmatprep.subr.mxu0 0.0
  %387 = vmatpush1.msra.mxu0 0.0
  %388 = vmatprep.subr.mxu0 0.0
  %389 = vmatpush1.msra.mxu0 0.0
  %390 = vmatprep.subr.mxu0 0.0
  %391 = vmatpush1.msra.mxu0 0.0
  %392 = vmatprep.subr.mxu0 0.0
  %393 = vmatpush1.msra.mxu0 0.0
  %394 = vmatprep.subr.mxu0 0.0
  %395 = vmatpush1.msra.mxu0 0.0
  %396 = vmatprep.subr.mxu0 0.0
  %397 = vmatpush1.msra.mxu0 0.0
  %398 = vmatprep.subr.mxu0 0.0
  %399 = vmatpush1.msra.mxu0 0.0
  %400 = vmatprep.subr.mxu0 0.0
  %401 = vmatpush1.msra.mxu0 0.0
  %402 = vmatprep.subr.mxu0 0.0
  %403 = vmatpush1.msra.mxu0 0.0
  %404 = vmatprep.subr.mxu0 0.0
  %405 = vmatpush1.msra.mxu0 0.0
  %406 = vmatprep.subr.mxu0 0.0
  %407 = vmatpush1.msra.mxu0 0.0
  %408 = vmatprep.subr.mxu0 0.0
  %409 = vmatpush1.msra.mxu0 0.0
  %410 = vmatprep.subr.mxu0 0.0
  %411 = vmatpush1.msra.mxu0 0.0
  %412 = vmatprep.subr.mxu0 0.0
  %413 = vmatpush1.msra.mxu0 0.0
  %414 = vmatprep.subr.mxu0 0.0
  %415 = vmatpush1.msra.mxu0 0.0
  %416 = vmatprep.subr.mxu0 0.0
  %417 = vmatpush1.msra.mxu0 0.0
  %418 = vmatprep.subr.mxu0 0.0
  %419 = vmatpush1.msra.mxu0 0.0
  %420 = vmatprep.subr.mxu0 0.0
  %421 = vmatpush1.msra.mxu0 0.0
  %422 = vmatprep.subr.mxu0 0.0
  %423 = vmatpush1.msra.mxu0 0.0
  %424 = vmatprep.subr.mxu0 0.0
  %425 = vmatpush1.msra.mxu0 0.0
  %426 = vmatprep.subr.mxu0 0.0
  %427 = vmatpush1.msra.mxu0 0.0
  %428 = vmatprep.subr.mxu0 0.0
  %429 = vmatpush1.msra.mxu0 0.0
  %430 = vmatprep.subr.mxu0 0.0
  %431 = vmatpush1.msra.mxu0 0.0
  %432 = vmatprep.mubr.f32.mxu0 0.0
  %433 = vmatmul.mubr.f32.gmra.mrb[0].mxu0 %v286
  %v434 = vpop.f32.mrb[0].mxu0
  %v435 = vadd.f32 %v277, %v434
  %v436 = vpop.f32.mrb[0].mxu0
  %v437 = vadd.f32 %v277, %v436
  %438 = vmatprep.mubr.f32.mxu0 0.0
  %439 = vmatmul.mubr.f32.gmra.mrb[0].mxu0 %v289
  %v440 = vpop.f32.mrb[0].mxu0
  %v441 = vadd.f32 %v282, %v440
  %v442 = vpop.f32.mrb[0].mxu0
  %v443 = vadd.f32 %v282, %v442
  %444 = vdwg.mxu0
  %v445 = vrot.slane %v358, 4
  %v446 = vmax.f32 %v358, %v445
  %v447 = vrot.slane %v446, 2
  %v448 = vmax.f32 %v446, %v447
  %v449 = vrot.slane %v448, 1
  %v450 = vmax.f32 %v448, %v449
  %v451 = vrot.slane %v360, 4
  %v452 = vmax.f32 %v360, %v451
  %v453 = vrot.slane %v452, 2
  %v454 = vmax.f32 %v452, %v453
  %v455 = vrot.slane %v454, 1
  %v456 = vmax.f32 %v454, %v455
  %v457 = vrot.slane %v435, 4
  %v458 = vmax.f32 %v435, %v457
  %v459 = vrot.slane %v458, 2
  %v460 = vmax.f32 %v458, %v459
  %v461 = vrot.slane %v460, 1
  %v462 = vmax.f32 %v460, %v461
  %v463 = vrot.slane %v437, 4
  %v464 = vmax.f32 %v437, %v463
  %v465 = vrot.slane %v464, 2
  %v466 = vmax.f32 %v464, %v465
  %v467 = vrot.slane %v466, 1
  %v468 = vmax.f32 %v466, %v467
  %v469 = vlaneseq
  %v470 = vshrl.u32 %v469, 7
  %vm471 = vcmp.ge.f32.partialorder %v358, %v450
  %vm472 = vcmp.ge.f32.partialorder %v360, %v456
  %vm473 = vcmp.ge.f32.partialorder %v435, %v462
  %vm474 = vcmp.ge.f32.partialorder %v437, %v468
  %v475 = vsel %vm471, %v470, 8
  %v476 = vsel %vm472, %v470, 8
  %v477 = vsel %vm473, %v470, 8
  %v478 = vsel %vm474, %v470, 8
  %v479 = vrot.slane %v475, 4
  %vm480 = vcmp.lt.s32.totalorder %v475, %v479
  %v481 = vsel %vm480, %v475, %v479
  %v482 = vrot.slane %v481, 2
  %vm483 = vcmp.lt.s32.totalorder %v481, %v482
  %v484 = vsel %vm483, %v481, %v482
  %v485 = vrot.slane %v484, 1
  %vm486 = vcmp.lt.s32.totalorder %v484, %v485
  %v487 = vsel %vm486, %v484, %v485
  %v488 = vrot.slane %v476, 4
  %vm489 = vcmp.lt.s32.totalorder %v476, %v488
  %v490 = vsel %vm489, %v476, %v488
  %v491 = vrot.slane %v490, 2
  %vm492 = vcmp.lt.s32.totalorder %v490, %v491
  %v493 = vsel %vm492, %v490, %v491
  %v494 = vrot.slane %v493, 1
  %vm495 = vcmp.lt.s32.totalorder %v493, %v494
  %v496 = vsel %vm495, %v493, %v494
  %v497 = vrot.slane %v477, 4
  %vm498 = vcmp.lt.s32.totalorder %v477, %v497
  %v499 = vsel %vm498, %v477, %v497
  %v500 = vrot.slane %v499, 2
  %vm501 = vcmp.lt.s32.totalorder %v499, %v500
  %v502 = vsel %vm501, %v499, %v500
  %v503 = vrot.slane %v502, 1
  %vm504 = vcmp.lt.s32.totalorder %v502, %v503
  %v505 = vsel %vm504, %v502, %v503
  %v506 = vrot.slane %v478, 4
  %vm507 = vcmp.lt.s32.totalorder %v478, %v506
  %v508 = vsel %vm507, %v478, %v506
  %v509 = vrot.slane %v508, 2
  %vm510 = vcmp.lt.s32.totalorder %v508, %v509
  %v511 = vsel %vm510, %v508, %v509
  %v512 = vrot.slane %v511, 1
  %vm513 = vcmp.lt.s32.totalorder %v511, %v512
  %v514 = vsel %vm513, %v511, %v512
  %v515 = vcvt.s32.f32 %v487
  %v516 = vcvt.s32.f32 %v496
  %v517 = vcvt.s32.f32 %v505
  %v518 = vcvt.s32.f32 %v514
  %v519 = vxor.u32 %v450, 2147483648
  %v520 = vxor.u32 %v456, 2147483648
  %v521 = vxor.u32 %v462, 2147483648
  %v522 = vxor.u32 %v468, 2147483648
  %v523 = vmul.f32 %v519, 1.442695
  %v524 = vpow.pop %v523
  %v525 = vmul.f32 %v520, 1.442695
  %v526 = vpow.pop %v525
  %v527 = vmul.f32 %v521, 1.442695
  %v528 = vpow.pop %v527
  %v529 = vmul.f32 %v522, 1.442695
  %v530 = vpow.pop %v529
  %v531 = vadd.f32 %v524, 1.0
  %v532 = vadd.f32 %v526, 1.0
  %v533 = vadd.f32 %v528, 1.0
  %v534 = vadd.f32 %v530, 1.0
  %v535 = vrcp.pop %v531
  %v536 = vmul.f32 1.0, %v535
  %v537 = vrcp.pop %v532
  %v538 = vmul.f32 1.0, %v537
  %v539 = vrcp.pop %v533
  %v540 = vmul.f32 1.0, %v539
  %v541 = vrcp.pop %v534
  %v542 = vmul.f32 1.0, %v541
  %v543 = vxor.u32 %v364, 2147483648
  %v544 = vxor.u32 %v366, 2147483648
  %v545 = vxor.u32 %v441, 2147483648
  %v546 = vxor.u32 %v443, 2147483648
  %v547 = vmul.f32 %v543, 1.442695
  %v548 = vpow.pop %v547
  %v549 = vmul.f32 %v544, 1.442695
  %v550 = vpow.pop %v549
  %v551 = vmul.f32 %v545, 1.442695
  %v552 = vpow.pop %v551
  %v553 = vmul.f32 %v546, 1.442695
  %v554 = vpow.pop %v553
  %v555 = vadd.f32 %v548, 1.0
  %v556 = vadd.f32 %v550, 1.0
  %v557 = vadd.f32 %v552, 1.0
  %v558 = vadd.f32 %v554, 1.0
  %v559 = vrcp.pop %v555
  %v560 = vmul.f32 1.0, %v559
  %v561 = vrcp.pop %v556
  %v562 = vmul.f32 1.0, %v561
  %v563 = vrcp.pop %v557
  %v564 = vmul.f32 1.0, %v563
  %v565 = vrcp.pop %v558
  %v566 = vmul.f32 1.0, %v565
  %v567 = vmul.f32 %v560, 0.5
  %v568 = vmul.f32 %v562, 0.5
  %v569 = vmul.f32 %v564, 0.5
  %v570 = vmul.f32 %v566, 0.5
  %v575 = vrot.slane %v567, 2
  %v576 = vrot.slane %v568, 2
  %v577 = vrot.slane %v569, 2
  %v578 = vrot.slane %v570, 2
  %v583 = vsub.f32 %v560, %v575
  %v584 = vsub.f32 %v562, %v576
  %v585 = vsub.f32 %v564, %v577
  %v586 = vsub.f32 %v566, %v578
  %v587 = vmul.f32 %v583, 16.0
  %v588 = vmul.f32 %v584, 16.0
  %v589 = vmul.f32 %v585, 16.0
  %v590 = vmul.f32 %v586, 16.0
  %v591 = vmul.f32 %v560, 16.0
  %v592 = vmul.f32 %v562, 16.0
  %v593 = vmul.f32 %v564, 16.0
  %v594 = vmul.f32 %v566, 16.0
  %v599 = vcombine.low %v515, %v516
  %v600 = vcombine.low %v517, %v518
  %v602 = vunpack.c.l.s4 1966171168
  %v603 = vunpack.c.0.s8 %v602
  %v604 = vlaneseq
  %v605 = vshrl.u32 %v604, 7
  %v606 = vsub.s32 %v603, %v605
  %v607 = vrot.slane %v599, %v606
  %v609 = vunpack.c.l.s4 1966171168
  %v610 = vunpack.c.0.s8 %v609
  %v611 = vlaneseq
  %v612 = vshrl.u32 %v611, 7
  %v613 = vsub.s32 %v610, %v612
  %v614 = vrot.slane %v600, %v613
  %v615 = vcombine.low %v607, %v614
  %v617 = vunpack.c.l.s4 1966171168
  %v618 = vunpack.c.0.s8 %v617
  %v619 = vlaneseq
  %v620 = vshrl.u32 %v619, 7
  %v621 = vsub.s32 %v618, %v620
  %v622 = vrot.slane %v615, %v621
  %v624 = vlaneseq
  %vm625 = vcmp.ge.s32.totalorder %v624, 0
  %vm626 = vcmp.lt.s32.totalorder %v624, 512
  %vm627 = vmand %vm625, %vm626
  %628 = vst.msk [vmem:[%s5] ss:$8 sm:$0xf] %vm627, %v622
  %629 = vst.msk [vmem:[%s5] ss:$8 sm:$0x0] %vm627, %v622
  %v634 = vcombine.low %v536, %v538
  %v635 = vcombine.low %v540, %v542
  %v637 = vunpack.c.l.s4 1966171168
  %v638 = vunpack.c.0.s8 %v637
  %v639 = vlaneseq
  %v640 = vshrl.u32 %v639, 7
  %v641 = vsub.s32 %v638, %v640
  %v642 = vrot.slane %v634, %v641
  %v644 = vunpack.c.l.s4 1966171168
  %v645 = vunpack.c.0.s8 %v644
  %v646 = vlaneseq
  %v647 = vshrl.u32 %v646, 7
  %v648 = vsub.s32 %v645, %v647
  %v649 = vrot.slane %v635, %v648
  %v650 = vcombine.low %v642, %v649
  %v652 = vunpack.c.l.s4 1966171168
  %v653 = vunpack.c.0.s8 %v652
  %v654 = vlaneseq
  %v655 = vshrl.u32 %v654, 7
  %v656 = vsub.s32 %v653, %v655
  %v657 = vrot.slane %v650, %v656
  %s659 = scalar_lea.vmem %s5, 1
  %660 = vst.msk [vmem:[%s659] ss:$8 sm:$0xf] %vm627, %v657
  %661 = vst.msk [vmem:[%s659] ss:$8 sm:$0x0] %vm627, %v657
  %v666 = vcombine.low %v587, %v588
  %v667 = vcombine.low %v589, %v590
  %v669 = vunpack.c.l.s4 1966171168
  %v670 = vunpack.c.0.s8 %v669
  %v671 = vlaneseq
  %v672 = vshrl.u32 %v671, 7
  %v673 = vsub.s32 %v670, %v672
  %v674 = vrot.slane %v666, %v673
  %v676 = vunpack.c.l.s4 1966171168
  %v677 = vunpack.c.0.s8 %v676
  %v678 = vlaneseq
  %v679 = vshrl.u32 %v678, 7
  %v680 = vsub.s32 %v677, %v679
  %v681 = vrot.slane %v667, %v680
  %v682 = vcombine.low %v674, %v681
  %v684 = vunpack.c.l.s4 1966171168
  %v685 = vunpack.c.0.s8 %v684
  %v686 = vlaneseq
  %v687 = vshrl.u32 %v686, 7
  %v688 = vsub.s32 %v685, %v687
  %v689 = vrot.slane %v682, %v688
  %s691 = scalar_lea.vmem %s5, 2
  %692 = vst.msk [vmem:[%s691] ss:$8 sm:$0xf] %vm627, %v689
  %693 = vst.msk [vmem:[%s691] ss:$8 sm:$0x0] %vm627, %v689
  %v694 = vcombine.high %v674, %v681
  %v696 = vunpack.c.l.s4 1966171168
  %v697 = vunpack.c.0.s8 %v696
  %v698 = vlaneseq
  %v699 = vshrl.u32 %v698, 7
  %v700 = vsub.s32 %v697, %v699
  %v701 = vrot.slane %v694, %v700
  %s703 = scalar_lea.vmem %s5, 3
  %704 = vst.msk [vmem:[%s703] ss:$8 sm:$0xf] %vm627, %v701
  %705 = vst.msk [vmem:[%s703] ss:$8 sm:$0x0] %vm627, %v701
  %v710 = vcombine.low %v591, %v592
  %v711 = vcombine.low %v593, %v594
  %v713 = vunpack.c.l.s4 1966171168
  %v714 = vunpack.c.0.s8 %v713
  %v715 = vlaneseq
  %v716 = vshrl.u32 %v715, 7
  %v717 = vsub.s32 %v714, %v716
  %v718 = vrot.slane %v710, %v717
  %v720 = vunpack.c.l.s4 1966171168
  %v721 = vunpack.c.0.s8 %v720
  %v722 = vlaneseq
  %v723 = vshrl.u32 %v722, 7
  %v724 = vsub.s32 %v721, %v723
  %v725 = vrot.slane %v711, %v724
  %v726 = vcombine.low %v718, %v725
  %v728 = vunpack.c.l.s4 1966171168
  %v729 = vunpack.c.0.s8 %v728
  %v730 = vlaneseq
  %v731 = vshrl.u32 %v730, 7
  %v732 = vsub.s32 %v729, %v731
  %v733 = vrot.slane %v726, %v732
  %v734 = vcombine.high %v733, %v733
  %s736 = scalar_lea.vmem %s5, 4
  %737 = vst.msk [vmem:[%s736] ss:$8 sm:$0xf] %vm627, %v734
  %738 = vst.msk [vmem:[%s736] ss:$8 sm:$0x0] %vm627, %v734
  %v739 = vcombine.high %v718, %v725
  %v741 = vunpack.c.l.s4 1966171168
  %v742 = vunpack.c.0.s8 %v741
  %v743 = vlaneseq
  %v744 = vshrl.u32 %v743, 7
  %v745 = vsub.s32 %v742, %v744
  %v746 = vrot.slane %v739, %v745
  %v747 = vcombine.high %v746, %v746
  %s749 = scalar_lea.vmem %s5, 5
  %750 = vst.msk [vmem:[%s749] ss:$8 sm:$0xf] %vm627, %v747
  %751 = vst.msk [vmem:[%s749] ss:$8 sm:$0x0] %vm627, %v747
  %752 = vst [vmem:[%s5] sm:$0xc0] 0.0
  %753 = vst [vmem:[%s5 + $0x8] sm:$0xc0] 0.0
  %754 = vst [vmem:[%s5 + $0x10] sm:$0xc0] 0.0
  %755 = vst [vmem:[%s5 + $0x18] sm:$0xc0] 0.0
  // Predicated region
  $region22: #{_forward.1} parent=0 // pred_check
    _
  $region23: #{_forward.1} parent=0 // pred_check_branch
    %757 = sbr.rel (0) target = $region25
  $region24: #{_forward.1} parent=0 // pred_region
    _
  $region25: #{_forward.1} parent=0 // pred_fallthru
    _
  // Predicated region
  $region26: #{_forward.1} parent=0 // pred_check
    _
  $region27: #{_forward.1} parent=0 // pred_check_branch
    %759 = sbr.rel (0) target = $region29
  $region28: #{_forward.1} parent=0 // pred_region
    _
  $region29: #{_forward.1} parent=0 // pred_fallthru
    _

</llo_original>
